<compile_context>
chip_gen: v5e
topology: v5e:2x2
jax: 0.10.0
libtpu: 0.0.40
codegen_flags: <defaults>
</compile_context>

<pallas_src>
import functools

import jax
import jax.numpy as jnp
from jax import lax
from jax.experimental import pallas as pl
from jax.experimental.pallas import tpu as pltpu


def _focal_loss_kernel(inputs_ref, targets_ref, alpha_ref, out_ref, acc_ref, *,
                       gamma, n_total, tile_n, tiles_per_split, size_average):
    p = pl.program_id(0)   # split axis (parallel -> both TCs on v7x)
    i = pl.program_id(1)   # batch-tile axis (reduction, "arbitrary")

    @pl.when(i == 0)
    def _init():
        acc_ref[...] = jnp.zeros_like(acc_ref)

    x = inputs_ref[...].astype(jnp.float32)          # (TN, C)
    t = targets_ref[...]                             # (TN, 1) int32
    a = alpha_ref[...].astype(jnp.float32)           # (1, C)
    tn, c = x.shape

    # one-hot target mask via broadcasted iota compared against target ids
    col = lax.broadcasted_iota(jnp.int32, (tn, c), 1)
    mask = (col == t).astype(jnp.float32)            # (TN, C)

    # log-softmax gathered at the target class (no (TN,C) divide, no log(0))
    m = jnp.max(x, axis=1, keepdims=True)                        # (TN, 1)
    denom = jnp.sum(jnp.exp(x - m), axis=1, keepdims=True)       # (TN, 1)
    x_t = jnp.sum(x * mask, axis=1, keepdims=True)               # target logit
    alpha_row = jnp.sum(a * mask, axis=1, keepdims=True)         # (TN, 1)
    log_p = (x_t - m) - jnp.log(denom)                           # finite, <= 0
    probs = jnp.exp(log_p)

    one_minus = 1.0 - probs
    g = float(gamma)
    if g == int(g) and 0 <= int(g) <= 8:             # static: small-int gamma
        w = jnp.ones_like(one_minus)
        for _ in range(int(g)):
            w = w * one_minus
    else:
        w = jnp.power(one_minus, g)

    focal = -alpha_row * w * log_p                   # (TN, 1)

    # mask rows past the true batch size (partial / clamped duplicate tiles)
    tile_idx = p * tiles_per_split + i
    row = tile_idx * tile_n + lax.broadcasted_iota(jnp.int32, (tn, 1), 0)
    focal = jnp.where(row < n_total, focal, 0.0)

    acc_ref[...] += jnp.sum(focal, axis=0, keepdims=True)        # (1, 1)

    @pl.when(i == pl.num_programs(1) - 1)
    def _finalize():
        val = acc_ref[...]                           # (1, 1)
        if size_average:
            val = val / jnp.float32(n_total)
        rsel = lax.broadcasted_iota(jnp.int32, (8, 128), 0) == 0
        csel = lax.broadcasted_iota(jnp.int32, (8, 128), 1) == 0
        out_ref[...] = jnp.where(rsel & csel, val, 0.0)


def _pick_tile_n(n, c):
    # ~4 MiB per input buffer (x2 for double-buffering ~= 8 MiB of VMEM):
    # fits the default scoped-VMEM limit on v5e/v6e and v7x's 64 MiB VMEM.
    budget_bytes = 4 * 1024 * 1024
    tn = budget_bytes // (max(int(c), 1) * 4)
    tn = max(8, min(1024, tn))
    tn = (tn // 8) * 8
    return n if tn >= n else tn


def focal_loss_multilabel(inputs, targets, alpha, *, gamma=2, size_average=True,
                          tile_n=None):
    """inputs: (N, C) float, targets: (N,) int, alpha: (C, 1) float -> scalar."""
    n, c = inputs.shape
    targets_2d = targets.reshape(n, 1).astype(jnp.int32)
    alpha_row = jnp.asarray(alpha).reshape(1, c)

    if tile_n is None:
        tile_n = _pick_tile_n(n, c)
    tile_n = min(int(tile_n), n)
    if tile_n < n and tile_n % 8 != 0:
        tile_n = max(8, (tile_n // 8) * 8)

    num_tiles = pl.cdiv(n, tile_n)
    num_splits = 2 if num_tiles >= 2 else 1          # feed both TCs on v7x
    tiles_per_split = pl.cdiv(num_tiles, num_splits)

    def row_block(pidx, iidx):
        # clamp so duplicated tail tiles never DMA out of bounds; the kernel
        # masks their rows (global row index >= n) before accumulating.
        t = jnp.minimum(pidx * tiles_per_split + iidx, num_tiles - 1)
        return (t, 0)

    kernel = functools.partial(
        _focal_loss_kernel, gamma=float(gamma), n_total=n, tile_n=tile_n,
        tiles_per_split=tiles_per_split, size_average=bool(size_average))

    out = pl.pallas_call(
        kernel,
        out_shape=jax.ShapeDtypeStruct((num_splits * 8, 128), jnp.float32),
        grid_spec=pltpu.PrefetchScalarGridSpec(
            num_scalar_prefetch=0,
            grid=(num_splits, tiles_per_split),
            in_specs=[
                pl.BlockSpec((tile_n, c), row_block),      # logits tile
                pl.BlockSpec((tile_n, 1), row_block),      # target ids tile
                pl.BlockSpec((1, c), lambda pidx, iidx: (0, 0)),  # alpha row
            ],
            out_specs=pl.BlockSpec((8, 128), lambda pidx, iidx: (pidx, 0)),
            scratch_shapes=[pltpu.VMEM((1, 1), jnp.float32)],
        ),
        compiler_params=pltpu.CompilerParams(
            dimension_semantics=("parallel", "arbitrary")),
    )(inputs, targets_2d, alpha_row)

    # one nonzero partial per split (already divided by N when size_average)
    return jnp.sum(out)


if __name__ == "__main__":
    key = jax.random.PRNGKey(0)
    k_in, k_tgt = jax.random.split(key)

    batch = 40
    class_num = 16

    inputs = jax.random.normal(k_in, (batch, class_num), dtype=jnp.float32)
    targets = jax.random.randint(k_tgt, (batch,), 0, class_num, dtype=jnp.int32)
    # non-uniform alpha to exercise the per-row alpha gather
    alpha = jnp.linspace(0.5, 1.5, class_num, dtype=jnp.float32).reshape(class_num, 1)

    # small tile to exercise the tiled / two-split / masked-tail path
    loss = focal_loss_multilabel(inputs, targets, alpha, gamma=2,
                                 size_average=True, tile_n=16)
    jax.block_until_ready(loss)

    # pure-JAX reference (softmax + one-hot gather focal loss, mean)
    p = jax.nn.softmax(inputs, axis=1)
    probs = jnp.take_along_axis(p, targets[:, None], axis=1)
    a_row = alpha[targets, 0][:, None]
    ref = jnp.mean(-a_row * (1.0 - probs) ** 2 * jnp.log(probs))
    assert jnp.allclose(loss, ref, rtol=1e-5, atol=1e-6), (loss, ref)

    print("KERNEL_OK")
</pallas_src>

<mosaic_0001>
module attributes {stable_mosaic.version = 11 : i64} {
  func.func @_focal_loss_kernel(%arg0: i32, %arg1: i32, %arg2: memref<16x16xf32, #tpu.memory_space<vmem>>, %arg3: memref<16x1xi32, #tpu.memory_space<vmem>>, %arg4: memref<1x16xf32, #tpu.memory_space<vmem>>, %arg5: memref<8x128xf32, #tpu.memory_space<vmem>>, %arg6: memref<1x1xf32, #tpu.memory_space<vmem>>) attributes {dimension_semantics = [#tpu.dimension_semantics<parallel>, #tpu.dimension_semantics<arbitrary>], iteration_bounds = array<i64: 2, 2>, scalar_prefetch = 0 : i64, scratch_operands = 1 : i64, tpu.core_type = #tpu.core_type<tc>, window_params = [{transform_indices = @transform_0, window_bounds = array<i64: 16, 16>}, {transform_indices = @transform_1, window_bounds = array<i64: 16, 1>}, {pipeline_mode = #tpu.pipeline_mode<synchronous>, transform_indices = @transform_2, window_bounds = array<i64: 1, 16>}, {transform_indices = @transform_3, window_bounds = array<i64: 8, 128>}]} {
    %c0_i32 = arith.constant 0 : i32
    %0 = arith.cmpi eq, %arg1, %c0_i32 : i32
    %1 = arith.extui %0 : i1 to i32
    %c0_i32_0 = arith.constant 0 : i32
    %2 = arith.cmpi ne, %1, %c0_i32_0 : i32
    scf.if %2 {
      %cst_19 = arith.constant 0.000000e+00 : f32
      %56 = vector.broadcast %cst_19 : f32 to vector<1x1xf32>
      %c0_20 = arith.constant 0 : index
      %c0_21 = arith.constant 0 : index
      %57 = vector.load %arg6[%c0_20, %c0_21] : memref<1x1xf32, #tpu.memory_space<vmem>>, vector<1x1xf32>
      tpu.vector_store %arg6[%c0_20, %c0_21], %56 {strides = array<i32>} : memref<1x1xf32, #tpu.memory_space<vmem>>, vector<1x1xf32>,
    } else {
    }
    %c0 = arith.constant 0 : index
    %c0_1 = arith.constant 0 : index
    %3 = vector.load %arg2[%c0, %c0_1] : memref<16x16xf32, #tpu.memory_space<vmem>>, vector<16x16xf32>
    %c0_2 = arith.constant 0 : index
    %c0_3 = arith.constant 0 : index
    %4 = vector.load %arg3[%c0_2, %c0_3] : memref<16x1xi32, #tpu.memory_space<vmem>>, vector<16x1xi32>
    %c0_4 = arith.constant 0 : index
    %c0_5 = arith.constant 0 : index
    %5 = vector.load %arg4[%c0_4, %c0_5] : memref<1x16xf32, #tpu.memory_space<vmem>>, vector<1x16xf32>
    %6 = tpu.iota {dimensions = array<i32: 1>} : vector<16x16xi32>
    %7 = vector.broadcast %4 : vector<16x1xi32> to vector<16x16xi32>
    %8 = arith.cmpi eq, %6, %7 : vector<16x16xi32>
    %9 = arith.extui %8 : vector<16x16xi1> to vector<16x16xi32>
    %10 = arith.sitofp %9 : vector<16x16xi32> to vector<16x16xf32>
    %cst = arith.constant dense<0xFF800000> : vector<16xf32>
    %11 = vector.multi_reduction <maximumf>, %3, %cst [1] : vector<16x16xf32> to vector<16xf32>
    %12 = vector.shape_cast %11 : vector<16xf32> to vector<16x1xf32>
    %13 = vector.broadcast %12 : vector<16x1xf32> to vector<16x16xf32>
    %14 = arith.subf %3, %13 : vector<16x16xf32>
    %15 = math.exp %14 : vector<16x16xf32>
    %cst_6 = arith.constant dense<0.000000e+00> : vector<16xf32>
    %16 = vector.multi_reduction <add>, %15, %cst_6 [1] : vector<16x16xf32> to vector<16xf32>
    %17 = vector.shape_cast %16 : vector<16xf32> to vector<16x1xf32>
    %18 = arith.mulf %3, %10 : vector<16x16xf32>
    %cst_7 = arith.constant dense<0.000000e+00> : vector<16xf32>
    %19 = vector.multi_reduction <add>, %18, %cst_7 [1] : vector<16x16xf32> to vector<16xf32>
    %20 = vector.shape_cast %19 : vector<16xf32> to vector<16x1xf32>
    %21 = vector.broadcast %5 : vector<1x16xf32> to vector<16x16xf32>
    %22 = arith.mulf %21, %10 : vector<16x16xf32>
    %cst_8 = arith.constant dense<0.000000e+00> : vector<16xf32>
    %23 = vector.multi_reduction <add>, %22, %cst_8 [1] : vector<16x16xf32> to vector<16xf32>
    %24 = vector.shape_cast %23 : vector<16xf32> to vector<16x1xf32>
    %25 = arith.subf %20, %12 : vector<16x1xf32>
    %26 = math.log %17 : vector<16x1xf32>
    %27 = arith.subf %25, %26 : vector<16x1xf32>
    %28 = math.exp %27 : vector<16x1xf32>
    %cst_9 = arith.constant 1.000000e+00 : f32
    %29 = vector.broadcast %cst_9 : f32 to vector<16x1xf32>
    %30 = arith.subf %29, %28 : vector<16x1xf32>
    %cst_10 = arith.constant 1.000000e+00 : f32
    %31 = vector.broadcast %cst_10 : f32 to vector<16x1xf32>
    %32 = arith.mulf %31, %30 : vector<16x1xf32>
    %33 = arith.mulf %32, %30 : vector<16x1xf32>
    %cst_11 = arith.constant 0.000000e+00 : f32
    %34 = vector.broadcast %cst_11 : f32 to vector<16x1xf32>
    %35 = arith.subf %34, %24 : vector<16x1xf32>
    %36 = arith.mulf %35, %33 : vector<16x1xf32>
    %37 = arith.mulf %36, %27 : vector<16x1xf32>
    %c2_i32 = arith.constant 2 : i32
    %38 = arith.muli %arg0, %c2_i32 : i32
    %39 = arith.addi %38, %arg1 : i32
    %c16_i32 = arith.constant 16 : i32
    %40 = arith.muli %39, %c16_i32 : i32
    %41 = tpu.iota {dimensions = array<i32: 0>} : vector<16x1xi32>
    %42 = vector.broadcast %40 : i32 to vector<16x1xi32>
    %43 = arith.addi %42, %41 : vector<16x1xi32>
    %c40_i32 = arith.constant 40 : i32
    %44 = vector.broadcast %c40_i32 : i32 to vector<16x1xi32>
    %45 = arith.cmpi slt, %43, %44 : vector<16x1xi32>
    %cst_12 = arith.constant 0.000000e+00 : f32
    %46 = vector.broadcast %cst_12 : f32 to vector<16x1xf32>
    %47 = arith.select %45, %37, %46 : vector<16x1xi1>, vector<16x1xf32>
    %c0_13 = arith.constant 0 : index
    %c0_14 = arith.constant 0 : index
    %48 = vector.load %arg6[%c0_13, %c0_14] : memref<1x1xf32, #tpu.memory_space<vmem>>, vector<1x1xf32>
    %cst_15 = arith.constant dense<0.000000e+00> : vector<1xf32>
    %49 = vector.multi_reduction <add>, %47, %cst_15 [0] : vector<16x1xf32> to vector<1xf32>
    %50 = vector.shape_cast %49 : vector<1xf32> to vector<1x1xf32>
    %51 = arith.addf %48, %50 : vector<1x1xf32>
    %c0_16 = arith.constant 0 : index
    %c0_17 = arith.constant 0 : index
    %52 = vector.load %arg6[%c0_16, %c0_17] : memref<1x1xf32, #tpu.memory_space<vmem>>, vector<1x1xf32>
    tpu.vector_store %arg6[%c0_16, %c0_17], %51 {strides = array<i32>} : memref<1x1xf32, #tpu.memory_space<vmem>>, vector<1x1xf32>,
    %c1_i32 = arith.constant 1 : i32
    %53 = arith.cmpi eq, %arg1, %c1_i32 : i32
    %54 = arith.extui %53 : i1 to i32
    %c0_i32_18 = arith.constant 0 : i32
    %55 = arith.cmpi ne, %54, %c0_i32_18 : i32
    scf.if %55 {
      %c0_19 = arith.constant 0 : index
      %c0_20 = arith.constant 0 : index
      %56 = vector.load %arg6[%c0_19, %c0_20] : memref<1x1xf32, #tpu.memory_space<vmem>>, vector<1x1xf32>
      %cst_21 = arith.constant 4.000000e+01 : f32
      %57 = vector.broadcast %cst_21 : f32 to vector<1x1xf32>
      %58 = arith.divf %56, %57 : vector<1x1xf32>
      %59 = tpu.iota {dimensions = array<i32: 0>} : vector<8x128xi32>
      %c0_i32_22 = arith.constant 0 : i32
      %60 = vector.broadcast %c0_i32_22 : i32 to vector<8x128xi32>
      %61 = arith.cmpi eq, %59, %60 : vector<8x128xi32>
      %62 = tpu.iota {dimensions = array<i32: 1>} : vector<8x128xi32>
      %c0_i32_23 = arith.constant 0 : i32
      %63 = vector.broadcast %c0_i32_23 : i32 to vector<8x128xi32>
      %64 = arith.cmpi eq, %62, %63 : vector<8x128xi32>
      %65 = arith.andi %61, %64 : vector<8x128xi1>
      %cst_24 = arith.constant 0.000000e+00 : f32
      %66 = vector.shape_cast %58 : vector<1x1xf32> to vector<1x1xf32>
      %67 = vector.broadcast %66 : vector<1x1xf32> to vector<8x128xf32>
      %68 = vector.broadcast %cst_24 : f32 to vector<8x128xf32>
      %69 = arith.select %65, %67, %68 : vector<8x128xi1>, vector<8x128xf32>
      %c0_25 = arith.constant 0 : index
      %c0_26 = arith.constant 0 : index
      %70 = vector.load %arg5[%c0_25, %c0_26] : memref<8x128xf32, #tpu.memory_space<vmem>>, vector<8x128xf32>
      tpu.vector_store %arg5[%c0_25, %c0_26], %69 {strides = array<i32>} : memref<8x128xf32, #tpu.memory_space<vmem>>, vector<8x128xf32>,
    } else {
    }
    return
  }
  func.func @transform_0(%arg0: i32, %arg1: i32) -> (i32, i32) {
    %c2_i32 = arith.constant 2 : i32
    %0 = arith.muli %arg0, %c2_i32 : i32
    %1 = arith.addi %0, %arg1 : i32
    %c2_i32_0 = arith.constant 2 : i32
    %2 = arith.minsi %1, %c2_i32_0 : i32
    %c0_i32 = arith.constant 0 : i32
    %c0_i32_1 = arith.constant 0 : i32
    return %2, %c0_i32 : i32, i32
  }
  func.func @transform_1(%arg0: i32, %arg1: i32) -> (i32, i32) {
    %c2_i32 = arith.constant 2 : i32
    %0 = arith.muli %arg0, %c2_i32 : i32
    %1 = arith.addi %0, %arg1 : i32
    %c2_i32_0 = arith.constant 2 : i32
    %2 = arith.minsi %1, %c2_i32_0 : i32
    %c0_i32 = arith.constant 0 : i32
    %c0_i32_1 = arith.constant 0 : i32
    return %2, %c0_i32 : i32, i32
  }
  func.func @transform_2(%arg0: i32, %arg1: i32) -> (i32, i32) {
    %c0_i32 = arith.constant 0 : i32
    %c0_i32_0 = arith.constant 0 : i32
    %c0_i32_1 = arith.constant 0 : i32
    return %c0_i32, %c0_i32_0 : i32, i32
  }
  func.func @transform_3(%arg0: i32, %arg1: i32) -> (i32, i32) {
    %c0_i32 = arith.constant 0 : i32
    %c0_i32_0 = arith.constant 0 : i32
    return %arg0, %c0_i32 : i32, i32
  }
}

</mosaic_0001>

<llo_original>
// kernel: tpu_custom_call.1
$region0: #{tpu_custom_call.1}
  #allocation0 [shape = 'u32[]', space=smem, size = 0x4, offset = 0x4, fixed_abs, tag = 'smem constant byte address 0x4 - core index']
  #allocation1 [shape = 'u32[72,128]{1,0:T(1,128)}', space=vmem, size = 0x9000, scoped, tag = 'internal scratch']
  #allocation2 [shape = 'f32[1,1]{1,0:T(1,128)}', space=vmem, size = 0x200, scoped, tag = 'scratch operand']
  %s0 = inlined_call_operand.vmem [shape: f32[40,16], index: 0, kind: input, shape index: {}]
  %s1 = inlined_call_operand.vmem [shape: s32[40,1], index: 1, kind: input, shape index: {}]
  %s2 = inlined_call_operand.vmem [shape: f32[1,16], index: 2, kind: input, shape index: {}]
  %s3 = inlined_call_operand.hbm [shape: f32[16,128], index: 3, kind: output, shape index: {}]
  %s4 = sld [smem:[#allocation0]]
  $region53: #{tpu_custom_call.1} parent=0
    _
  %s6 = ssub.s32 1, %s4
  %s7 = scalar_select 0, %s6, %s4
  $region1: #{tpu_custom_call.1} parent=0
    #allocation3 [shape = 'u8[8192]{0}', space=vmem, size = 0x2000, scoped, tag = 'output window, operand 0']
    #allocation4 [shape = 's32[2]{0}', space=sflag, size = 0x8, scoped, tag = 'scoped memory for tpu_custom_call.1']
    %8 = vsyncpa [#allocation4], 0
    %s9 = scalar_lea.sflag [#allocation4], 1
    %10 = vsyncpa %s9, 0
    loop: start=0, step=1, limit=6
    $region2: #{tpu_custom_call.1} parent=1 // loop_pre_header
      _
    $region3: #{tpu_custom_call.1} parent=1 // loop_header
      %s12 = sphi 0, %s16
      %p13 = scmp.ge.s32.totalorder %s12, 6
      %s19 = sphi 0, %s31
      %s20 = sphi 0, %s27
      %s21 = sphi 0, %s19
      %s22 = sphi 0, %s20
      %s23 = sphi 0, %s21
      %s24 = sphi 0, %s22
      %s42 = sphi 0, %s44
      %s45 = sphi 0, %s42
      %s46 = sphi 0, %s45
      %s62 = sphi 0, %s46
      %s76 = sphi 0, %s78
      %s79 = sphi 0, %s76
      %s80 = sphi 0, %s79
      %s96 = sphi 0, %s80
      %s100 = sphi 0, %s100
      %s102 = sphi 0, %s100
      %s103 = sphi 0, %s102
      %s117 = sphi 0, %s103
      %s123 = sphi 0, %s125
      %s126 = sphi 0, %s123
      %s127 = sphi 0, %s126
      %s143 = sphi 0, %s127
    $region4: #{tpu_custom_call.1} parent=1 // loop_header_branch
      %15 = sbr.rel (%p13) target = $region8
    $region5: #{tpu_custom_call.1} parent=1 // loop_body
      %s17 = ssub.s32 %s12, 1
      %s18 = ssub.s32 %s12, 2
      %s25 = sadd.s32 1, %s20
      %p26 = scmp.ge.s32.totalorder %s25, 2
      %s27 = scalar_select %p26, 0, %s25
      %s28 = sadd.s32 1, %s19
      %s29 = scalar_select %p26, %s28, %s19
      %p30 = scmp.ge.s32.totalorder %s29, 2
      %s31 = scalar_select %p30, 0, %s29
      %s32 = smul.u32 %s19, 2
      %s33 = sadd.s32 %s32, %s20
      %p34 = scmp.lt.s32.totalorder %s33, 2
      %s35 = scalar_select %p34, %s33, 2
      %s36 = smul.u32 %s31, 2
      %s37 = sadd.s32 %s36, %s27
      %p38 = scmp.lt.s32.totalorder %s37, 2
      %s39 = scalar_select %p38, %s37, 2
      %s40 = ssub.s32 %s35, %s39
      %p41 = scmp.eq.s32.totalorder %s40, 0
      %s43 = sadd.s32 %s42, 1
      %s44 = scalar_select %p41, %s42, %s43
      %p47 = pneg %p41
      %p48 = scmp.eq.s32.totalorder %s12, 3
      %p49 = por %p47, %p48
      %p50 = scmp.ne.s32.totalorder %s42, %s45
      %p51 = scmp.eq.s32.totalorder %s12, 0
      %p52 = por %p50, %p51
      %p53 = scmp.ne.s32.totalorder %s42, %s45
      %p54 = scmp.eq.s32.totalorder %s17, 3
      %p55 = por %p53, %p54
      %p56 = scmp.ne.s32.totalorder %s45, %s46
      %p57 = scmp.eq.s32.totalorder %s17, 0
      %p58 = por %p56, %p57
      %p59 = scmp.ne.s32.totalorder %s45, %s46
      %p60 = scmp.eq.s32.totalorder %s18, 3
      %p61 = por %p59, %p60
      %p63 = scmp.ne.s32.totalorder %s46, %s62
      %p64 = scmp.eq.s32.totalorder %s18, 0
      %p65 = por %p63, %p64
      %s66 = smul.u32 %s19, 2
      %s67 = sadd.s32 %s66, %s20
      %p68 = scmp.lt.s32.totalorder %s67, 2
      %s69 = scalar_select %p68, %s67, 2
      %s70 = smul.u32 %s31, 2
      %s71 = sadd.s32 %s70, %s27
      %p72 = scmp.lt.s32.totalorder %s71, 2
      %s73 = scalar_select %p72, %s71, 2
      %s74 = ssub.s32 %s69, %s73
      %p75 = scmp.eq.s32.totalorder %s74, 0
      %s77 = sadd.s32 %s76, 1
      %s78 = scalar_select %p75, %s76, %s77
      %p81 = pneg %p75
      %p82 = scmp.eq.s32.totalorder %s12, 3
      %p83 = por %p81, %p82
      %p84 = scmp.ne.s32.totalorder %s76, %s79
      %p85 = scmp.eq.s32.totalorder %s12, 0
      %p86 = por %p84, %p85
      %p87 = scmp.ne.s32.totalorder %s76, %s79
      %p88 = scmp.eq.s32.totalorder %s17, 3
      %p89 = por %p87, %p88
      %p90 = scmp.ne.s32.totalorder %s79, %s80
      %p91 = scmp.eq.s32.totalorder %s17, 0
      %p92 = por %p90, %p91
      %p93 = scmp.ne.s32.totalorder %s79, %s80
      %p94 = scmp.eq.s32.totalorder %s18, 3
      %p95 = por %p93, %p94
      %p97 = scmp.ne.s32.totalorder %s80, %s96
      %p98 = scmp.eq.s32.totalorder %s18, 0
      %p99 = por %p97, %p98
      %s101 = sadd.s32 %s100, 1
      %p104 = scmp.eq.s32.totalorder %s12, 3
      %p105 = scmp.ne.s32.totalorder %s100, %s102
      %p106 = scmp.eq.s32.totalorder %s12, 0
      %p107 = por %p105, %p106
      %p108 = scmp.ne.s32.totalorder %s100, %s102
      %p109 = scmp.eq.s32.totalorder %s17, 3
      %p110 = por %p108, %p109
      %p111 = scmp.ne.s32.totalorder %s102, %s103
      %p112 = scmp.eq.s32.totalorder %s17, 0
      %p113 = por %p111, %p112
      %p114 = scmp.ne.s32.totalorder %s102, %s103
      %p115 = scmp.eq.s32.totalorder %s18, 3
      %p116 = por %p114, %p115
      %p118 = scmp.ne.s32.totalorder %s103, %s117
      %p119 = scmp.eq.s32.totalorder %s18, 0
      %p120 = por %p118, %p119
      %s121 = ssub.s32 %s19, %s31
      %p122 = scmp.eq.s32.totalorder %s121, 0
      %s124 = sadd.s32 %s123, 1
      %s125 = scalar_select %p122, %s123, %s124
      %p128 = pneg %p122
      %p129 = scmp.eq.s32.totalorder %s12, 3
      %p130 = por %p128, %p129
      %p131 = scmp.ne.s32.totalorder %s123, %s126
      %p132 = scmp.eq.s32.totalorder %s12, 0
      %p133 = por %p131, %p132
      %p134 = scmp.ne.s32.totalorder %s123, %s126
      %p135 = scmp.eq.s32.totalorder %s17, 3
      %p136 = por %p134, %p135
      %p137 = scmp.ne.s32.totalorder %s126, %s127
      %p138 = scmp.eq.s32.totalorder %s17, 0
      %p139 = por %p137, %p138
      %p140 = scmp.ne.s32.totalorder %s126, %s127
      %p141 = scmp.eq.s32.totalorder %s18, 3
      %p142 = por %p140, %p141
      %p144 = scmp.ne.s32.totalorder %s127, %s143
      %p145 = scmp.eq.s32.totalorder %s18, 0
      %p146 = por %p144, %p145
      %p147 = scmp.le.s32.totalorder 1, %s12
      %p148 = scmp.lt.s32.totalorder %s12, 5
      %p149 = pnand %p147, %p148
      %p150 = pneg %p149
      // Predicated region
      $region9: #{tpu_custom_call.1} parent=5 // pred_check
        _
      $region10: #{tpu_custom_call.1} parent=5 // pred_check_branch
        %152 = sbr.rel (%p149) target = $region12
      $region11: #{tpu_custom_call.1} parent=5 // pred_region
        %s153 = ssub.s32 %s12, 1
        // Predicated region
        $region13: #{tpu_custom_call.1} parent=11 // pred_check
          %p154 = pneg %p113
        $region14: #{tpu_custom_call.1} parent=11 // pred_check_branch
          %156 = sbr.rel (%p154) target = $region16
        $region15: #{tpu_custom_call.1} parent=11 // pred_region
          _
        $region16: #{tpu_custom_call.1} parent=11 // pred_fallthru
          _
      $region12: #{tpu_custom_call.1} parent=5 // pred_fallthru
        _
      %p157 = scmp.lt.s32.totalorder %s12, 4
      // Predicated region
      $region17: #{tpu_custom_call.1} parent=5 // pred_check
        %p158 = pneg %p157
      $region18: #{tpu_custom_call.1} parent=5 // pred_check_branch
        %160 = sbr.rel (%p158) target = $region20
      $region19: #{tpu_custom_call.1} parent=5 // pred_region
        // Predicated region
        $region21: #{tpu_custom_call.1} parent=19 // pred_check
          %p161 = pneg %p52
        $region22: #{tpu_custom_call.1} parent=19 // pred_check_branch
          %163 = sbr.rel (%p161) target = $region24
        $region23: #{tpu_custom_call.1} parent=19 // pred_region
          %s164 = smul.u32 %s19, 2
          %s165 = sadd.s32 %s164, %s20
          %p166 = scmp.lt.s32.totalorder %s165, 2
          %s167 = scalar_select %p166, %s165, 2
          %s168 = smul.u32 2, %s167
          %s169 = ssub.s32 5, %s168
          %p170 = scmp.lt.s32.totalorder %s169, 2
          %s171 = scalar_select %p170, %s169, 2
          %s172 = smul.u32 8, %s171
          %p173 = scmp.lt.s32.totalorder %s168, 4
          %s174 = scalar_select %p173, %s168, 4
          %s175 = smul.addr %s174, 8
          %s176 = scalar_lea.vmem %s0, %s175
          %s177 = smul.u32 %s19, 2
          %s178 = sadd.s32 %s177, %s20
          %p179 = scmp.lt.s32.totalorder %s178, 2
          %s180 = scalar_select %p179, %s178, 2
          %s181 = smul.u32 2, %s180
          %s182 = ssub.s32 5, %s181
          %p183 = scmp.lt.s32.totalorder %s182, 2
          %s184 = scalar_select %p183, %s182, 2
          %s185 = smul.u32 8, %s184
        $region24: #{tpu_custom_call.1} parent=19 // pred_fallthru
          _
        // Predicated region
        $region25: #{tpu_custom_call.1} parent=19 // pred_check
          %p186 = pneg %p86
        $region26: #{tpu_custom_call.1} parent=19 // pred_check_branch
          %188 = sbr.rel (%p186) target = $region28
        $region27: #{tpu_custom_call.1} parent=19 // pred_region
          %s189 = smul.u32 %s19, 2
          %s190 = sadd.s32 %s189, %s20
          %p191 = scmp.lt.s32.totalorder %s190, 2
          %s192 = scalar_select %p191, %s190, 2
          %s193 = smul.u32 2, %s192
          %s194 = ssub.s32 5, %s193
          %p195 = scmp.lt.s32.totalorder %s194, 2
          %s196 = scalar_select %p195, %s194, 2
          %s197 = smul.u32 8, %s196
          %p198 = scmp.lt.s32.totalorder %s193, 4
          %s199 = scalar_select %p198, %s193, 4
          %s200 = smul.addr %s199, 8
          %s201 = scalar_lea.vmem %s1, %s200
          %s202 = smul.u32 %s19, 2
          %s203 = sadd.s32 %s202, %s20
          %p204 = scmp.lt.s32.totalorder %s203, 2
          %s205 = scalar_select %p204, %s203, 2
          %s206 = smul.u32 2, %s205
          %s207 = ssub.s32 5, %s206
          %p208 = scmp.lt.s32.totalorder %s207, 2
          %s209 = scalar_select %p208, %s207, 2
          %s210 = smul.u32 8, %s209
        $region28: #{tpu_custom_call.1} parent=19 // pred_fallthru
          _
      $region20: #{tpu_custom_call.1} parent=5 // pred_fallthru
        _
      %p211 = scmp.le.s32.totalorder 1, %s12
      %p212 = scmp.lt.s32.totalorder %s12, 5
      %p213 = pnand %p211, %p212
      %p214 = pneg %p213
      // Predicated region
      $region29: #{tpu_custom_call.1} parent=5 // pred_check
        _
      $region30: #{tpu_custom_call.1} parent=5 // pred_check_branch
        %216 = sbr.rel (%p213) target = $region32
      $region31: #{tpu_custom_call.1} parent=5 // pred_region
        %s217 = ssub.s32 %s12, 1
        %s218 = smul.u32 %s21, 2
        %s219 = sadd.s32 %s218, %s22
        %p220 = scmp.lt.s32.totalorder %s219, 2
        %s221 = scalar_select %p220, %s219, 2
        %s222 = smul.u32 2, %s221
        %s223 = ssub.s32 5, %s222
        %p224 = scmp.lt.s32.totalorder %s223, 2
        %s225 = scalar_select %p224, %s223, 2
        %s226 = smul.u32 8, %s225
        %p227 = scmp.lt.s32.totalorder %s222, 4
        %s228 = scalar_select %p227, %s222, 4
        %s229 = smul.addr %s228, 8
        %s230 = scalar_lea.vmem %s0, %s229
        %p231 = pneg %p58
        %p232 = pneg %p55
        %s233 = smul.u32 %s21, 2
        %s234 = sadd.s32 %s233, %s22
        %p235 = scmp.lt.s32.totalorder %s234, 2
        %s236 = scalar_select %p235, %s234, 2
        %s237 = smul.u32 2, %s236
        %s238 = ssub.s32 5, %s237
        %p239 = scmp.lt.s32.totalorder %s238, 2
        %s240 = scalar_select %p239, %s238, 2
        %s241 = smul.u32 8, %s240
        %p242 = scmp.lt.s32.totalorder %s237, 4
        %s243 = scalar_select %p242, %s237, 4
        %s244 = smul.addr %s243, 8
        %s245 = scalar_lea.vmem %s1, %s244
        %p246 = pneg %p92
        %p247 = pneg %p89
        %p248 = pneg %p113
        %p249 = pneg %p110
        %p250 = pneg %p139
        %p251 = pneg %p136
        %s252 = sand.u32 %s126, 1
        %s253 = scalar_lea.sflag [#allocation4], %s252
        %s254 = sand.u32 %s126, 1
        %s255 = smul.addr %s254, 8
        %s256 = scalar_lea.vmem [#allocation3], %s255
        %s257 = smul.u32 %s21, 2
        %s258 = sadd.s32 %s257, %s22
        %p259 = scmp.lt.s32.totalorder %s258, 2
        %s260 = scalar_select %p259, %s258, 2
        %s261 = smul.u32 2, %s260
        %s262 = ssub.s32 5, %s261
        %p263 = scmp.lt.s32.totalorder %s262, 2
        %s264 = scalar_select %p263, %s262, 2
        %s265 = smul.u32 8, %s264
        %p266 = scmp.lt.s32.totalorder %s261, 4
        %s267 = scalar_select %p266, %s261, 4
        %s268 = smul.addr %s267, 8
        %s269 = scalar_lea.vmem %s0, %s268
        %s270 = smul.u32 %s21, 2
        %s271 = sadd.s32 %s270, %s22
        %p272 = scmp.lt.s32.totalorder %s271, 2
        %s273 = scalar_select %p272, %s271, 2
        %s274 = smul.u32 2, %s273
        %s275 = ssub.s32 5, %s274
        %p276 = scmp.lt.s32.totalorder %s275, 2
        %s277 = scalar_select %p276, %s275, 2
        %s278 = smul.u32 8, %s277
        %s279 = smul.u32 %s21, 2
        %s280 = sadd.s32 %s279, %s22
        %p281 = scmp.lt.s32.totalorder %s280, 2
        %s282 = scalar_select %p281, %s280, 2
        %s283 = smul.u32 2, %s282
        %s284 = ssub.s32 5, %s283
        %p285 = scmp.lt.s32.totalorder %s284, 2
        %s286 = scalar_select %p285, %s284, 2
        %s287 = smul.u32 8, %s286
        %p288 = scmp.lt.s32.totalorder %s283, 4
        %s289 = scalar_select %p288, %s283, 4
        %s290 = smul.addr %s289, 8
        %s291 = scalar_lea.vmem %s1, %s290
        %s292 = smul.u32 %s21, 2
        %s293 = sadd.s32 %s292, %s22
        %p294 = scmp.lt.s32.totalorder %s293, 2
        %s295 = scalar_select %p294, %s293, 2
        %s296 = smul.u32 2, %s295
        %s297 = ssub.s32 5, %s296
        %p298 = scmp.lt.s32.totalorder %s297, 2
        %s299 = scalar_select %p298, %s297, 2
        %s300 = smul.u32 8, %s299
        %p301 = scmp.eq.s32.totalorder %s22, 0
        // Predicated region
        $region33: #{tpu_custom_call.1} parent=31 // pred_check
          %p302 = pneg %p301
        $region34: #{tpu_custom_call.1} parent=31 // pred_check_branch
          %304 = sbr.rel (%p302) target = $region36
        $region35: #{tpu_custom_call.1} parent=31 // pred_region
          %vm305 = vcmask 0
          %306 = vst.msk [vmem:[#allocation2] sm:$0x1] %vm305, 0.0
        $region36: #{tpu_custom_call.1} parent=31 // pred_fallthru
          _
        %v307 = vld [vmem:[%s269] sm:$0xff]
        %v308 = vld [vmem:[%s269 + $0x8] sm:$0xff]
        %v309 = vld [vmem:[%s291] sm:$0xff]
        %v310 = vld [vmem:[%s291 + $0x8] sm:$0xff]
        %v311 = vld [vmem:[%s2] sm:$0x1]
        %v312 = vlaneseq
        %v313 = vand.u32 %v312, 127
        %314 = vset.pattern.permute.xlu0 0
        %315 = vperm.xlu0 %314, %v309
        %v316 = vpop.permute.xlu0 %315
        %317 = vset.pattern.permute.xlu0 0
        %318 = vperm.xlu0 %317, %v310
        %v319 = vpop.permute.xlu0 %318
        %vm320 = vcmp.eq.s32.totalorder %v313, %v316
        %vm321 = vcmp.eq.s32.totalorder %v313, %v319
        %v322 = vsel %vm320, 1, 0
        %v323 = vsel %vm321, 1, 0
        %v324 = vcvt.s32.f32 %v322
        %v325 = vcvt.s32.f32 %v323
        %vm326 = vcmask 130048
        %v327 = vsel %vm326, %v307, -inf
        %328 = vmax.xlane.f32.xlu0 %v327
        %v329 = vpop.xlane.xlu0 %328
        %v330 = vsel %vm326, %v308, -inf
        %331 = vmax.xlane.f32.xlu0 %v330
        %v332 = vpop.xlane.xlu0 %331
        %v333 = vsub.f32 %v307, %v329
        %v334 = vsub.f32 %v308, %v332
        %v335 = vmul.f32 %v333, 1.442695
        %v336 = vpow.pop %v335
        %v337 = vmul.f32 %v334, 1.442695
        %v338 = vpow.pop %v337
        %v339 = vsel %vm326, %v336, 0.0
        %340 = vadd.xlane.f32.xlu0 %v339
        %v341 = vpop.xlane.xlu0 %340
        %v342 = vsel %vm326, %v338, 0.0
        %343 = vadd.xlane.f32.xlu0 %v342
        %v344 = vpop.xlane.xlu0 %343
        %v345 = vmul.f32 %v307, %v324
        %v346 = vmul.f32 %v308, %v325
        %v347 = vsel %vm326, %v345, 0.0
        %348 = vadd.xlane.f32.xlu0 %v347
        %v349 = vpop.xlane.xlu0 %348
        %v350 = vsel %vm326, %v346, 0.0
        %351 = vadd.xlane.f32.xlu0 %v350
        %v352 = vpop.xlane.xlu0 %351
        %v354 = vperm.slane %v311, 0
        %v356 = vmul.f32 %v354, %v324
        %v357 = vmul.f32 %v354, %v325
        %v358 = vsel %vm326, %v356, 0.0
        %359 = vadd.xlane.f32.xlu0 %v358
        %v360 = vpop.xlane.xlu0 %359
        %v361 = vsel %vm326, %v357, 0.0
        %362 = vadd.xlane.f32.xlu0 %v361
        %v363 = vpop.xlane.xlu0 %362
        %v364 = vsub.f32 %v349, %v329
        %v365 = vsub.f32 %v352, %v332
        %v366 = vlog2.pop %v341
        %v367 = vmul.f32 %v366, 0.6931472
        %v368 = vlog2.pop %v344
        %v369 = vmul.f32 %v368, 0.6931472
        %v370 = vsub.f32 %v364, %v367
        %v371 = vsub.f32 %v365, %v369
        %v372 = vmul.f32 %v370, 1.442695
        %v373 = vpow.pop %v372
        %v374 = vmul.f32 %v371, 1.442695
        %v375 = vpow.pop %v374
        %v376 = vsub.f32 1.0, %v373
        %v377 = vsub.f32 1.0, %v375
        %v378 = vmul.f32 %v376, %v376
        %v379 = vmul.f32 %v377, %v377
        %v380 = vsub.f32 0.0, %v360
        %v381 = vsub.f32 0.0, %v363
        %v382 = vmul.f32 %v380, %v378
        %v383 = vmul.f32 %v381, %v379
        %v384 = vmul.f32 %v382, %v370
        %v385 = vmul.f32 %v383, %v371
        %s386 = smul.u32 %s21, 2
        %s387 = sadd.s32 %s386, %s22
        %s388 = smul.u32 %s387, 16
        %v389 = vlaneseq
        %v390 = vshrl.u32 %v389, 7
        %v391 = vadd.s32 %v390, 8
        %v392 = vstv %s388
        %v393 = vadd.s32 %v392, %v390
        %v394 = vadd.s32 %v392, %v391
        %vm395 = vcmp.lt.s32.totalorder %v393, 40
        %vm396 = vcmp.lt.s32.totalorder %v394, 40
        %v397 = vsel %vm395, %v384, 0.0
        %v398 = vsel %vm396, %v385, 0.0
        %v399 = vld [vmem:[#allocation2] sm:$0x1]
        %v400 = vadd.f32 %v397, %v398
        %v401 = vrot.slane %v400, 4
        %v402 = vadd.f32 %v400, %v401
        %v403 = vrot.slane %v402, 2
        %v404 = vadd.f32 %v402, %v403
        %v405 = vrot.slane %v404, 1
        %v406 = vadd.f32 %v404, %v405
        %v407 = vadd.f32 %v399, %v406
        %vm408 = vcmask 0
        %409 = vst.msk [vmem:[#allocation2] sm:$0x1] %vm408, %v407
        %p410 = scmp.eq.s32.totalorder %s22, 1
        // Predicated region
        $region37: #{tpu_custom_call.1} parent=31 // pred_check
          %p411 = pneg %p410
        $region38: #{tpu_custom_call.1} parent=31 // pred_check_branch
          %413 = sbr.rel (%p411) target = $region40
        $region39: #{tpu_custom_call.1} parent=31 // pred_region
          %v414 = vld [vmem:[#allocation2] sm:$0x1]
          %v415 = vrcp.pop 40.0
          %v416 = vmul.f32 40.0, %v415
          %v417 = vsub.f32 1.0, %v416
          %v418 = vmul.f32 %v415, %v417
          %v419 = vadd.f32 %v415, %v418
          %vm420 = vweird.f32 %v415
          %v421 = vsel %vm420, %v415, %v419
          %v422 = vmul.f32 %v414, %v421
          %vm423 = vcmp.eq.s32.totalorder %v390, 0
          %vm424 = vcmp.eq.s32.totalorder %v313, 0
          %vm425 = vmand %vm423, %vm424
          %v427 = vperm.slane %v422, 0
          %428 = vset.pattern.permute.xlu0 0
          %429 = vperm.xlu0 %428, %v427
          %v430 = vpop.permute.xlu0 %429
          %v432 = vsel %vm425, %v430, 0.0
          %433 = vst [vmem:[%s256] sm:$0xff] %v432
        $region40: #{tpu_custom_call.1} parent=31 // pred_fallthru
          _
        %s434 = sand.u32 %s126, 1
        %s435 = scalar_lea.sflag [#allocation4], %s434
        %s436 = sand.u32 %s126, 1
        %s437 = smul.addr %s436, 8
        %s438 = scalar_lea.vmem [#allocation3], %s437
        // Predicated region
        $region41: #{tpu_custom_call.1} parent=31 // pred_check
          %p439 = pneg %p136
        $region42: #{tpu_custom_call.1} parent=31 // pred_check_branch
          %441 = sbr.rel (%p439) target = $region44
        $region43: #{tpu_custom_call.1} parent=31 // pred_region
          %443 = vsyncadd %s435, 0
          %s444 = smul.addr %s21, 8
          %s445 = scalar_lea.hbm %s3, %s444
          %s447 = sshll.u32 %s438, 4
          %s448 = int_to_ptr.vmem [resolvable:$true] %s447
          %s449 = sshll.u32 %s445, 4
          %s450 = int_to_ptr.hbm [resolvable:$true] %s449
          %452 = dma.vmem_to_hbm [thread:$0]  %s448, 128, %s450, %s435
        $region44: #{tpu_custom_call.1} parent=31 // pred_fallthru
          _
      $region32: #{tpu_custom_call.1} parent=5 // pred_fallthru
        _
      %p453 = scmp.le.s32.totalorder 2, %s12
      // Predicated region
      $region45: #{tpu_custom_call.1} parent=5 // pred_check
        %p454 = pneg %p453
      $region46: #{tpu_custom_call.1} parent=5 // pred_check_branch
        %456 = sbr.rel (%p454) target = $region48
      $region47: #{tpu_custom_call.1} parent=5 // pred_region
        %s457 = ssub.s32 %s12, 2
        // Predicated region
        $region49: #{tpu_custom_call.1} parent=47 // pred_check
          %p458 = pneg %p142
        $region50: #{tpu_custom_call.1} parent=47 // pred_check_branch
          %460 = sbr.rel (%p458) target = $region52
        $region51: #{tpu_custom_call.1} parent=47 // pred_region
          %s461 = sand.u32 %s127, 1
          %s462 = scalar_lea.sflag [#allocation4], %s461
          %s463 = sand.u32 %s127, 1
          %s464 = smul.addr %s463, 8
          %s465 = scalar_lea.vmem [#allocation3], %s464
          %467 = dma.done %s462, 128
        $region52: #{tpu_custom_call.1} parent=47 // pred_fallthru
          _
      $region48: #{tpu_custom_call.1} parent=5 // pred_fallthru
        _
    $region6: #{tpu_custom_call.1} parent=1 // loop_footer
      %s16 = sadd.s32 1, %s12
    $region7: #{tpu_custom_call.1} parent=1 // loop_footer_branch
      %11 = sbr.rel target = $region3
    $region8: #{tpu_custom_call.1} parent=1 // loop_exit
      _
    %468 = vsyncpa [#allocation4], 1
    %s469 = scalar_lea.sflag [#allocation4], 1
    %470 = vsyncpa %s469, 1

</llo_original>
